<compile_context>
chip_gen: v5e
topology: v5e:2x2
jax: 0.10.0
libtpu: 0.0.40
codegen_flags: <defaults>
</compile_context>

<pallas_src>
import jax
import jax.numpy as jnp
from jax.experimental import pallas as pl
from jax.experimental.pallas import tpu as pltpu


def _copy_kernel(x_ref, o_ref):
    # Pure same-shape copy: one vld + one vst per vreg, DMA-bound.
    o_ref[...] = x_ref[...]


def view_as_rows_of_64(x: jax.Array) -> jax.Array:
    """Equivalent of torch `x.view(-1, 64)` (row-major), via a lane-dense
    tiled Pallas copy.  All reshapes happen outside the kernel (zero-copy)."""
    total = 1
    for d in x.shape:
        total *= d
    assert total % 64 == 0, "total number of elements must be divisible by 64"
    rows64 = total // 64

    # Present the data to the kernel as a lane-dense 2D slab.  Prefer a
    # 128-wide last dim (unmasked stores); fall back to 64 if needed.
    lanes = 128 if total % 128 == 0 else 64
    R = total // lanes
    x2 = jnp.reshape(x, (R, lanes))  # free bitcast in XLA

    itemsize = jnp.dtype(x.dtype).itemsize
    sub = {4: 8, 2: 16, 1: 32}.get(itemsize, 8)  # sublane multiple per dtype

    # Cap tile size at ~2 MiB per buffer (4 resident buffers with double
    # buffering -> ~8 MiB, safe on v7x's smaller VMEM; plenty on v5e/v6e).
    max_tile_rows = max(sub, (2 * 1024 * 1024) // (lanes * itemsize))

    tile_r = R  # fallback: single full block (full-dim exception to (8,128))
    if R % sub == 0:
        cap = min(R, max_tile_rows)
        best = None
        d = sub
        while d <= cap:
            if R % d == 0:
                best = d
            d += sub
        if best is not None:
            tile_r = best

    grid = (R // tile_r,) if R % tile_r == 0 else (1,)
    if grid == (1,):
        tile_r = R

    out2 = pl.pallas_call(
        _copy_kernel,
        out_shape=jax.ShapeDtypeStruct((R, lanes), x.dtype),
        grid_spec=pltpu.PrefetchScalarGridSpec(
            num_scalar_prefetch=0,
            grid=grid,
            in_specs=[pl.BlockSpec((tile_r, lanes), lambda i: (i, 0))],
            out_specs=pl.BlockSpec((tile_r, lanes), lambda i: (i, 0)),
        ),
        compiler_params=pltpu.CompilerParams(
            dimension_semantics=("parallel",),  # lets v7x shard rows across 2 TCs
        ),
    )(x2)

    # Free metadata reshape to the torch .view(-1, 64) result shape.
    return jnp.reshape(out2, (rows64, 64))


if __name__ == "__main__":
    key = jax.random.PRNGKey(0)
    # Small NCHW input: batch=2, channels=4, spatial=16x16 -> 2048 elems -> (32, 64)
    x = jax.random.normal(key, (2, 4, 16, 16), dtype=jnp.float32)

    out = view_as_rows_of_64(x)
    out = jax.block_until_ready(out)

    # Verify against the pure-JAX reference (same semantics as torch .view(-1, 64)).
    ref = jnp.reshape(x, (-1, 64))
    assert out.shape == (32, 64), out.shape
    assert out.dtype == x.dtype
    assert bool(jnp.all(out == ref))

    print("KERNEL_OK")
</pallas_src>

<mosaic_0001>
module attributes {stable_mosaic.version = 11 : i64} {
  func.func @_copy_kernel(%arg0: i32, %arg1: memref<16x128xf32, #tpu.memory_space<vmem>>, %arg2: memref<16x128xf32, #tpu.memory_space<vmem>>) attributes {dimension_semantics = [#tpu.dimension_semantics<parallel>], iteration_bounds = array<i64: 1>, scalar_prefetch = 0 : i64, scratch_operands = 0 : i64, tpu.core_type = #tpu.core_type<tc>, window_params = [{transform_indices = @transform_0, window_bounds = array<i64: 16, 128>}, {transform_indices = @transform_1, window_bounds = array<i64: 16, 128>}]} {
    %c0 = arith.constant 0 : index
    %c0_0 = arith.constant 0 : index
    %0 = vector.load %arg1[%c0, %c0_0] : memref<16x128xf32, #tpu.memory_space<vmem>>, vector<16x128xf32>
    %c0_1 = arith.constant 0 : index
    %c0_2 = arith.constant 0 : index
    %1 = vector.load %arg2[%c0_1, %c0_2] : memref<16x128xf32, #tpu.memory_space<vmem>>, vector<16x128xf32>
    tpu.vector_store %arg2[%c0_1, %c0_2], %0 {strides = array<i32>} : memref<16x128xf32, #tpu.memory_space<vmem>>, vector<16x128xf32>,
    return
  }
  func.func @transform_0(%arg0: i32) -> (i32, i32) {
    %c0_i32 = arith.constant 0 : i32
    %c0_i32_0 = arith.constant 0 : i32
    return %arg0, %c0_i32 : i32, i32
  }
  func.func @transform_1(%arg0: i32) -> (i32, i32) {
    %c0_i32 = arith.constant 0 : i32
    %c0_i32_0 = arith.constant 0 : i32
    return %arg0, %c0_i32 : i32, i32
  }
}

</mosaic_0001>

<llo_original>
// kernel: tpu_custom_call.1
$region0: #{tpu_custom_call.1}
  #allocation0 [shape = 'u32[]', space=smem, size = 0x4, offset = 0x4, fixed_abs, tag = 'smem constant byte address 0x4 - core index']
  #allocation1 [shape = 'u32[72,128]{1,0:T(1,128)}', space=vmem, size = 0x9000, scoped, tag = 'internal scratch']
  %s0 = inlined_call_operand.hbm [shape: f32[16,128], index: 0, kind: input, shape index: {}]
  %s1 = inlined_call_operand.hbm [shape: f32[16,128], index: 1, kind: output, shape index: {}]
  %s2 = sld [smem:[#allocation0]]
  $region18: #{tpu_custom_call.1} parent=0
    _
  %s4 = ssub.s32 1, %s2
  %s5 = scalar_select 0, %s4, %s2
  $region1: #{tpu_custom_call.1} parent=0
    #allocation2 [shape = 'u8[8192]{0}', space=vmem, size = 0x2000, scoped, tag = 'input window, operand 0, single buffered']
    #allocation3 [shape = 's32[1]{0}', space=sflag, size = 0x4, scoped, tag = 'scoped memory for tpu_custom_call.1']
    #allocation4 [shape = 's32[1]{0}', space=sflag, size = 0x4, scoped, tag = 'scoped memory for tpu_custom_call.1']
    #allocation5 [shape = 'u8[8192]{0}', space=vmem, size = 0x2000, scoped, tag = 'output window, operand 0, single buffered']
    %6 = vsyncpa [#allocation3], 0
    %7 = vsyncpa [#allocation4], 0
    // Predicated region
    $region2: #{tpu_custom_call.1} parent=1 // pred_check
      _
    $region3: #{tpu_custom_call.1} parent=1 // pred_check_branch
      %9 = sbr.rel (0) target = $region5
    $region4: #{tpu_custom_call.1} parent=1 // pred_region
      %11 = vsyncadd [#allocation3], 0
      %s12 = sshll.u32 %s0, 4
      %s13 = int_to_ptr.hbm [resolvable:$true] %s12
      %s14 = sshll.u32 [#allocation2], 4
      %s15 = int_to_ptr.vmem [resolvable:$true] %s14
      %20 = dma.hbm_to_vmem [thread:$0]  %s13, 256, %s15, [#allocation3], 128, 128, 8
    $region5: #{tpu_custom_call.1} parent=1 // pred_fallthru
      _
    // Predicated region
    $region6: #{tpu_custom_call.1} parent=1 // pred_check
      _
    $region7: #{tpu_custom_call.1} parent=1 // pred_check_branch
      %22 = sbr.rel (0) target = $region9
    $region8: #{tpu_custom_call.1} parent=1 // pred_region
      %24 = dma.done [#allocation3], 256
    $region9: #{tpu_custom_call.1} parent=1 // pred_fallthru
      _
    %v25 = vld [vmem:[#allocation2] sm:$0xff]
    %v26 = vld [vmem:[#allocation2 + $0x8] sm:$0xff]
    %27 = vst [vmem:[#allocation5] sm:$0xff] %v25
    %28 = vst [vmem:[#allocation5 + $0x8] sm:$0xff] %v26
    // Predicated region
    $region10: #{tpu_custom_call.1} parent=1 // pred_check
      _
    $region11: #{tpu_custom_call.1} parent=1 // pred_check_branch
      %30 = sbr.rel (0) target = $region13
    $region12: #{tpu_custom_call.1} parent=1 // pred_region
      %32 = vsyncadd [#allocation4], 0
      %s33 = sshll.u32 [#allocation5], 4
      %s34 = int_to_ptr.vmem [resolvable:$true] %s33
      %s35 = sshll.u32 %s1, 4
      %s36 = int_to_ptr.hbm [resolvable:$true] %s35
      %41 = dma.vmem_to_hbm [thread:$0]  %s34, 256, %s36, [#allocation4], 128, 128, 8
    $region13: #{tpu_custom_call.1} parent=1 // pred_fallthru
      _
    // Predicated region
    $region14: #{tpu_custom_call.1} parent=1 // pred_check
      _
    $region15: #{tpu_custom_call.1} parent=1 // pred_check_branch
      %43 = sbr.rel (0) target = $region17
    $region16: #{tpu_custom_call.1} parent=1 // pred_region
      %45 = dma.done [#allocation4], 256
    $region17: #{tpu_custom_call.1} parent=1 // pred_fallthru
      _
    %46 = vsyncpa [#allocation3], 1
    %47 = vsyncpa [#allocation4], 1

</llo_original>
